<compile_context>
chip_gen: v7x
topology: tpu7x:2x2x1
jax: 0.10.0
libtpu: 0.0.40
codegen_flags: <defaults>
</compile_context>

<pallas_src>
import functools

import jax
import jax.numpy as jnp
from jax.experimental import pallas as pl
from jax.experimental.pallas import tpu as pltpu

_NEG = -1e30  # finite "minus infinity" for masked scores (exp -> 0, no NaNs)


def _round_up(x, m):
    return ((x + m - 1) // m) * m


# ----------------------------- Pallas kernels ------------------------------


def _init_step_kernel(x_ref, hid_ref, mem_in_ref, ua_in_ref,
                      uw_ref, ub_ref, vw_ref, uaw_ref,
                      h_ref, st_ref, mem_out_ref, ua_out_ref):
    """First step after reset: st = U(x) + V(hidden); h = tanh(st).

    Also appends h (and its cached projection Ua(h)) into slot 0 of the
    aliased memory / Ua caches.
    """
    del mem_in_ref, ua_in_ref  # aliased caches; only slot 0 is rewritten below
    st = (jnp.dot(x_ref[...], uw_ref[...], preferred_element_type=jnp.float32)
          + ub_ref[...]
          + jnp.dot(hid_ref[...], vw_ref[...], preferred_element_type=jnp.float32))
    h = jnp.tanh(st)
    st_ref[...] = st
    h_ref[...] = h
    mem_out_ref[0] = h.astype(mem_out_ref.dtype)
    ua_out_ref[0] = jnp.dot(h, uaw_ref[...],
                            preferred_element_type=jnp.float32).astype(ua_out_ref.dtype)


def _attn_step_kernel(t_ref,                                   # scalar prefetch: [t]
                      x_ref, st_ref, mem_ref, ua_ref,
                      uw_ref, ub_ref, vw_ref, vaw_ref, uaw_ref, v_ref,
                      h_ref, st_new_ref, es_ref, alpha_ref, mem_out_ref, ua_out_ref,
                      m_scr, ctx_scr, va_scr, last_scr,
                      *, attn):
    phase = pl.program_id(0)            # 0: scores + softmax, 1: context + update
    i = pl.program_id(1)                # time-tile index
    nt = pl.num_programs(1)
    t_len = t_ref[0]                    # number of valid memory entries
    tt = ua_ref.shape[0]                # static time-tile size
    nb = es_ref.shape[1]                # batch
    start = pl.multiple_of(i * tt, tt)
    active = start < t_len

    # ---------------- phase 0: attention scores + exact softmax -------------
    @pl.when(jnp.logical_and(phase == 0, i == 0))
    def _phase0_init():
        m_scr[...] = jnp.full(m_scr.shape, -jnp.inf, jnp.float32)
        ctx_scr[...] = jnp.zeros(ctx_scr.shape, jnp.float32)
        # query projection Va(st) is reused by every time tile
        va_scr[...] = jnp.dot(st_ref[...], vaw_ref[...],
                              preferred_element_type=jnp.float32)

    @pl.when(jnp.logical_and(phase == 0, active))
    def _phase0_scores():
        ua = ua_ref[...].astype(jnp.float32)                        # (tt, B, H)
        s = jnp.tanh(ua + va_scr[...][None, :, :])                  # (tt, B, H)
        es_tb = jnp.sum(s * v_ref[...][None, :, :], axis=-1)        # (tt, B)
        tpos = start + jax.lax.broadcasted_iota(jnp.int32, (tt, nb), 0)
        es_tb = jnp.where(tpos < t_len, es_tb, _NEG)
        es_ref[pl.ds(start, tt), :] = es_tb
        m_scr[...] = jnp.maximum(m_scr[...],
                                 jnp.max(es_tb, axis=0, keepdims=True))

    @pl.when(jnp.logical_and(phase == 0, jnp.logical_not(active)))
    def _phase0_pad():
        es_ref[pl.ds(start, tt), :] = jnp.full((tt, nb), _NEG, jnp.float32)

    @pl.when(jnp.logical_and(phase == 0, i == nt - 1))
    def _phase0_softmax():
        p = jnp.exp(es_ref[...] - m_scr[...])                       # masked rows -> 0
        alpha_ref[...] = p / jnp.sum(p, axis=0, keepdims=True)

    # ---------------- phase 1: context accumulation + recurrent update ------
    @pl.when(jnp.logical_and(phase == 1, active))
    def _phase1_context():
        mem = mem_ref[...].astype(jnp.float32)                      # (tt, B, H)
        a = alpha_ref[pl.ds(start, tt), :]                          # (tt, B)
        ctx_scr[...] += jnp.sum(a[:, :, None] * mem, axis=0)        # (B, H)

        last_idx = t_len - 1                                        # memory[-1]

        @pl.when(jnp.logical_and(last_idx >= start, last_idx < start + tt))
        def _capture_last():
            last_scr[...] = mem_ref[last_idx - start].astype(jnp.float32)

    @pl.when(jnp.logical_and(phase == 1, i == nt - 1))
    def _phase1_finalize():
        st_new = 0.5 * (last_scr[...] + ctx_scr[...] * attn)
        st_new_ref[...] = st_new
        h_pre = (jnp.dot(x_ref[...], uw_ref[...], preferred_element_type=jnp.float32)
                 + ub_ref[...]
                 + jnp.dot(st_new, vw_ref[...], preferred_element_type=jnp.float32))
        h = jnp.tanh(h_pre)
        h_ref[...] = h
        # append h_t and Ua(h_t) into slot t of the (aliased) caches
        mem_out_ref[0] = h.astype(mem_out_ref.dtype)
        ua_out_ref[0] = jnp.dot(h, uaw_ref[...],
                                preferred_element_type=jnp.float32
                                ).astype(ua_out_ref.dtype)


# ------------------------------ Host wrappers -------------------------------


@functools.partial(jax.jit, donate_argnums=(2, 3))
def _init_step(x, hidden, mem_cache, ua_cache, params):
    T_max, B, H = mem_cache.shape
    I = x.shape[1]
    cdt = mem_cache.dtype
    return pl.pallas_call(
        _init_step_kernel,
        grid=(1,),
        in_specs=[
            pl.BlockSpec((B, I), lambda i: (0, 0)),          # x
            pl.BlockSpec((B, H), lambda i: (0, 0)),          # hidden
            pl.BlockSpec((1, B, H), lambda i: (0, 0, 0)),    # memory cache (aliased)
            pl.BlockSpec((1, B, H), lambda i: (0, 0, 0)),    # Ua cache (aliased)
            pl.BlockSpec((I, H), lambda i: (0, 0)),          # Uw
            pl.BlockSpec((1, H), lambda i: (0, 0)),          # Ub
            pl.BlockSpec((H, H), lambda i: (0, 0)),          # Vw
            pl.BlockSpec((H, H), lambda i: (0, 0)),          # Uaw
        ],
        out_specs=(
            pl.BlockSpec((B, H), lambda i: (0, 0)),          # h
            pl.BlockSpec((B, H), lambda i: (0, 0)),          # st
            pl.BlockSpec((1, B, H), lambda i: (0, 0, 0)),    # memory slot 0
            pl.BlockSpec((1, B, H), lambda i: (0, 0, 0)),    # Ua slot 0
        ),
        out_shape=(
            jax.ShapeDtypeStruct((B, H), jnp.float32),
            jax.ShapeDtypeStruct((B, H), jnp.float32),
            jax.ShapeDtypeStruct((T_max, B, H), cdt),
            jax.ShapeDtypeStruct((T_max, B, H), cdt),
        ),
        # flat inputs: x(0) hidden(1) mem(2) ua(3) Uw(4) Ub(5) Vw(6) Uaw(7)
        input_output_aliases={2: 2, 3: 3},
    )(x, hidden, mem_cache, ua_cache,
      params["Uw"], params["Ub"], params["Vw"], params["Uaw"])


@functools.partial(jax.jit, static_argnames=("attn",), donate_argnums=(3, 4))
def _attn_step(t_arr, x, st, mem_cache, ua_cache, params, *, attn):
    T_max, B, H = mem_cache.shape
    I = x.shape[1]
    cdt = mem_cache.dtype
    tt = 128 if T_max >= 128 else T_max          # time-tile (VMEM independent of T_max)
    assert T_max % tt == 0
    nt = T_max // tt

    grid_spec = pltpu.PrefetchScalarGridSpec(
        num_scalar_prefetch=1,
        grid=(2, nt),                            # (phase, time tile)
        in_specs=[
            pl.BlockSpec((B, I), lambda p, i, t: (0, 0)),                    # x
            pl.BlockSpec((B, H), lambda p, i, t: (0, 0)),                    # st (query)
            pl.BlockSpec((tt, B, H), lambda p, i, t: (i * p, 0, 0)),         # memory cache
            pl.BlockSpec((tt, B, H), lambda p, i, t: (i * (1 - p), 0, 0)),   # Ua cache
            pl.BlockSpec((I, H), lambda p, i, t: (0, 0)),                    # Uw
            pl.BlockSpec((1, H), lambda p, i, t: (0, 0)),                    # Ub
            pl.BlockSpec((H, H), lambda p, i, t: (0, 0)),                    # Vw
            pl.BlockSpec((H, H), lambda p, i, t: (0, 0)),                    # Vaw
            pl.BlockSpec((H, H), lambda p, i, t: (0, 0)),                    # Uaw
            pl.BlockSpec((1, H), lambda p, i, t: (0, 0)),                    # v
        ],
        out_specs=[
            pl.BlockSpec((B, H), lambda p, i, t: (0, 0)),                    # h
            pl.BlockSpec((B, H), lambda p, i, t: (0, 0)),                    # st_new
            pl.BlockSpec((T_max, B), lambda p, i, t: (0, 0)),                # es
            pl.BlockSpec((T_max, B), lambda p, i, t: (0, 0)),                # alphas
            pl.BlockSpec((1, B, H), lambda p, i, t: (t[0], 0, 0)),           # mem slot t
            pl.BlockSpec((1, B, H), lambda p, i, t: (t[0], 0, 0)),           # Ua slot t
        ],
        scratch_shapes=[
            pltpu.VMEM((1, B), jnp.float32),    # running max
            pltpu.VMEM((B, H), jnp.float32),    # context accumulator
            pltpu.VMEM((B, H), jnp.float32),    # Va(st)
            pltpu.VMEM((B, H), jnp.float32),    # memory[-1]
        ],
    )
    return pl.pallas_call(
        functools.partial(_attn_step_kernel, attn=float(attn)),
        grid_spec=grid_spec,
        out_shape=(
            jax.ShapeDtypeStruct((B, H), jnp.float32),       # h
            jax.ShapeDtypeStruct((B, H), jnp.float32),       # st_new
            jax.ShapeDtypeStruct((T_max, B), jnp.float32),   # es   (rows >= t: padding)
            jax.ShapeDtypeStruct((T_max, B), jnp.float32),   # alphas (rows >= t: 0)
            jax.ShapeDtypeStruct((T_max, B, H), cdt),        # memory cache (aliased)
            jax.ShapeDtypeStruct((T_max, B, H), cdt),        # Ua cache (aliased)
        ),
        # flat inputs: t(0) x(1) st(2) mem(3) ua(4) Uw(5) Ub(6) Vw(7) Vaw(8) Uaw(9) v(10)
        input_output_aliases={3: 4, 4: 5},
        compiler_params=pltpu.CompilerParams(
            dimension_semantics=("arbitrary", "arbitrary")),
    )(t_arr, x, st, mem_cache, ua_cache,
      params["Uw"], params["Ub"], params["Vw"], params["Vaw"],
      params["Uaw"], params["v"])


def _xavier_normal(key, shape):
    fan_out, fan_in = shape[0], shape[1]
    std = (2.0 / (fan_in + fan_out)) ** 0.5
    return std * jax.random.normal(key, shape, dtype=jnp.float32)


class MemRNNPallas:
    """Stateful wrapper mirroring MemRNN.forward (nonlin='tanh', bias=True)."""

    def __init__(self, inp_size, hid_size, key, max_len=128,
                 cache_dtype=jnp.bfloat16):
        self.inp_size = inp_size
        self.hidden_size = hid_size
        self.cache_dtype = cache_dtype
        tt = 128 if max_len >= 128 else _round_up(max_len, 8)
        self.t_max = _round_up(max_len, tt)
        k = jax.random.split(key, 5)
        # Weights stored pre-transposed: (in_features, out_features).
        self.params = {
            "Uw":  _xavier_normal(k[0], (hid_size, inp_size)).T,   # U.weight
            "Ub":  jnp.zeros((1, hid_size), jnp.float32),          # U.bias
            "Vw":  _xavier_normal(k[1], (hid_size, hid_size)).T,   # V.weight
            "Uaw": _xavier_normal(k[2], (hid_size, hid_size)).T,   # Ua.weight
            "Vaw": _xavier_normal(k[3], (hid_size, hid_size)).T,   # Va.weight
            "v":   _xavier_normal(k[4], (1, hid_size)),            # v
        }
        self.mem_cache = None
        self.ua_cache = None
        self.st = None
        self.t = 0
        self.count = 0

    def __call__(self, x, hidden, attn=1.0, reset=False):
        x = jnp.asarray(x, jnp.float32)
        B, H = x.shape[0], self.hidden_size
        es = alphas = None
        if hidden is None or reset:
            self.count = 0
            if hidden is None:
                hidden = jnp.zeros((B, H), jnp.float32)
            self.mem_cache = jnp.zeros((self.t_max, B, H), self.cache_dtype)
            self.ua_cache = jnp.zeros((self.t_max, B, H), self.cache_dtype)
            h, st, self.mem_cache, self.ua_cache = _init_step(
                x, jnp.asarray(hidden, jnp.float32),
                self.mem_cache, self.ua_cache, self.params)
            self.st = st
            self.t = 1
        else:
            if self.t >= self.t_max:
                raise ValueError("memory capacity exceeded; increase max_len")
            t_arr = jnp.asarray([self.t], jnp.int32)
            (h, st_new, es_full, alphas_full,
             self.mem_cache, self.ua_cache) = _attn_step(
                t_arr, x, self.st, self.mem_cache, self.ua_cache, self.params,
                attn=float(attn))
            self.st = st_new
            es = es_full[: self.t]        # (t, B): matches the reference layout
            alphas = alphas_full[: self.t]
            self.t += 1
        if self.count == 0:
            self.count = 1
            return h, (None, None), None
        return h, (es, alphas), None


# ---------------------------------- Demo ------------------------------------

if __name__ == "__main__":
    B, I, H, SEQ = 2, 4, 32, 8
    key = jax.random.PRNGKey(0)
    k_cell, k_x = jax.random.split(key)

    cell = MemRNNPallas(I, H, k_cell, max_len=SEQ)
    x_seq = jax.random.normal(k_x, (SEQ, B, I), dtype=jnp.float32)

    hidden = None
    outputs = []
    es = alphas = None
    for t in range(SEQ):
        h, (es, alphas), _ = cell(x_seq[t], hidden, attn=1.0, reset=(t == 0))
        hidden = h
        outputs.append(h)

    out = jax.block_until_ready(jnp.stack(outputs))
    assert out.shape == (SEQ, B, H)
    assert bool(jnp.all(jnp.isfinite(out)))
    # attention weights of the last step: (SEQ-1, B), summing to 1 over time
    assert alphas.shape == (SEQ - 1, B)
    assert bool(jnp.all(jnp.isfinite(es)))
    assert bool(jnp.allclose(jnp.sum(alphas, axis=0), 1.0, atol=1e-5))
    # the in-place (aliased) cache appends must hold exactly the per-step outputs
    cached = cell.mem_cache[:SEQ].astype(jnp.float32)
    expect = out.astype(cell.cache_dtype).astype(jnp.float32)
    assert bool(jnp.allclose(cached, expect, atol=1e-2))
    print("KERNEL_OK")
</pallas_src>

<mosaic_0001>
module attributes {stable_mosaic.version = 11 : i64} {
  func.func @_init_step_kernel(%arg0: i32, %arg1: memref<2x4xf32, #tpu.memory_space<vmem>>, %arg2: memref<2x32xf32, #tpu.memory_space<vmem>>, %arg3: memref<1x2x32xbf16, #tpu.memory_space<vmem>>, %arg4: memref<1x2x32xbf16, #tpu.memory_space<vmem>>, %arg5: memref<4x32xf32, #tpu.memory_space<vmem>>, %arg6: memref<1x32xf32, #tpu.memory_space<vmem>>, %arg7: memref<32x32xf32, #tpu.memory_space<vmem>>, %arg8: memref<32x32xf32, #tpu.memory_space<vmem>>, %arg9: memref<2x32xf32, #tpu.memory_space<vmem>>, %arg10: memref<2x32xf32, #tpu.memory_space<vmem>>, %arg11: memref<1x2x32xbf16, #tpu.memory_space<vmem>>, %arg12: memref<1x2x32xbf16, #tpu.memory_space<vmem>>) attributes {dimension_semantics = [#tpu.dimension_semantics<arbitrary>], iteration_bounds = array<i64: 1>, scalar_prefetch = 0 : i64, scratch_operands = 0 : i64, tpu.core_type = #tpu.core_type<tc>, window_params = [{pipeline_mode = #tpu.pipeline_mode<synchronous>, transform_indices = @transform_0, window_bounds = array<i64: 2, 4>}, {pipeline_mode = #tpu.pipeline_mode<synchronous>, transform_indices = @transform_1, window_bounds = array<i64: 2, 32>}, {transform_indices = @transform_2, window_bounds = array<i64: 1, 2, 32>}, {transform_indices = @transform_3, window_bounds = array<i64: 1, 2, 32>}, {pipeline_mode = #tpu.pipeline_mode<synchronous>, transform_indices = @transform_4, window_bounds = array<i64: 4, 32>}, {pipeline_mode = #tpu.pipeline_mode<synchronous>, transform_indices = @transform_5, window_bounds = array<i64: 1, 32>}, {pipeline_mode = #tpu.pipeline_mode<synchronous>, transform_indices = @transform_6, window_bounds = array<i64: 32, 32>}, {pipeline_mode = #tpu.pipeline_mode<synchronous>, transform_indices = @transform_7, window_bounds = array<i64: 32, 32>}, {pipeline_mode = #tpu.pipeline_mode<synchronous>, transform_indices = @transform_8, window_bounds = array<i64: 2, 32>}, {pipeline_mode = #tpu.pipeline_mode<synchronous>, transform_indices = @transform_9, window_bounds = array<i64: 2, 32>}, {transform_indices = @transform_10, window_bounds = array<i64: 1, 2, 32>}, {transform_indices = @transform_11, window_bounds = array<i64: 1, 2, 32>}]} {
    %c0 = arith.constant 0 : index
    %c0_0 = arith.constant 0 : index
    %0 = vector.load %arg1[%c0, %c0_0] : memref<2x4xf32, #tpu.memory_space<vmem>>, vector<2x4xf32>
    %c0_1 = arith.constant 0 : index
    %c0_2 = arith.constant 0 : index
    %1 = vector.load %arg5[%c0_1, %c0_2] : memref<4x32xf32, #tpu.memory_space<vmem>>, vector<4x32xf32>
    %cst = arith.constant dense<0.000000e+00> : vector<2x32xf32>
    %2 = tpu.matmul %0, %1, %cst {dimension_numbers = #tpu.dot_dimension_numbers<[1], [0], [0], [1], [0, 0, 1, 1], [], []>} : vector<2x4xf32>, vector<4x32xf32>, vector<2x32xf32> -> vector<2x32xf32>
    %c0_3 = arith.constant 0 : index
    %c0_4 = arith.constant 0 : index
    %3 = vector.load %arg6[%c0_3, %c0_4] : memref<1x32xf32, #tpu.memory_space<vmem>>, vector<1x32xf32>
    %4 = vector.broadcast %3 : vector<1x32xf32> to vector<2x32xf32>
    %5 = arith.addf %2, %4 : vector<2x32xf32>
    %c0_5 = arith.constant 0 : index
    %c0_6 = arith.constant 0 : index
    %6 = vector.load %arg2[%c0_5, %c0_6] : memref<2x32xf32, #tpu.memory_space<vmem>>, vector<2x32xf32>
    %c0_7 = arith.constant 0 : index
    %c0_8 = arith.constant 0 : index
    %7 = vector.load %arg7[%c0_7, %c0_8] : memref<32x32xf32, #tpu.memory_space<vmem>>, vector<32x32xf32>
    %cst_9 = arith.constant dense<0.000000e+00> : vector<2x32xf32>
    %8 = tpu.matmul %6, %7, %cst_9 {dimension_numbers = #tpu.dot_dimension_numbers<[1], [0], [0], [1], [0, 0, 1, 1], [], []>} : vector<2x32xf32>, vector<32x32xf32>, vector<2x32xf32> -> vector<2x32xf32>
    %9 = arith.addf %5, %8 : vector<2x32xf32>
    %10 = math.tanh %9 : vector<2x32xf32>
    %c0_10 = arith.constant 0 : index
    %c0_11 = arith.constant 0 : index
    %11 = vector.load %arg10[%c0_10, %c0_11] : memref<2x32xf32, #tpu.memory_space<vmem>>, vector<2x32xf32>
    tpu.vector_store %arg10[%c0_10, %c0_11], %9 {strides = array<i32>} : memref<2x32xf32, #tpu.memory_space<vmem>>, vector<2x32xf32>,
    %c0_12 = arith.constant 0 : index
    %c0_13 = arith.constant 0 : index
    %12 = vector.load %arg9[%c0_12, %c0_13] : memref<2x32xf32, #tpu.memory_space<vmem>>, vector<2x32xf32>
    tpu.vector_store %arg9[%c0_12, %c0_13], %10 {strides = array<i32>} : memref<2x32xf32, #tpu.memory_space<vmem>>, vector<2x32xf32>,
    %13 = arith.truncf %10 : vector<2x32xf32> to vector<2x32xbf16>
    %c0_14 = arith.constant 0 : index
    %c0_15 = arith.constant 0 : index
    %c0_16 = arith.constant 0 : index
    %14 = vector.load %arg11[%c0_14, %c0_15, %c0_16] : memref<1x2x32xbf16, #tpu.memory_space<vmem>>, vector<1x2x32xbf16>
    %15 = vector.shape_cast %14 : vector<1x2x32xbf16> to vector<2x32xbf16>
    %16 = vector.shape_cast %13 : vector<2x32xbf16> to vector<1x2x32xbf16>
    tpu.vector_store %arg11[%c0_14, %c0_15, %c0_16], %16 {strides = array<i32>} : memref<1x2x32xbf16, #tpu.memory_space<vmem>>, vector<1x2x32xbf16>,
    %c0_17 = arith.constant 0 : index
    %c0_18 = arith.constant 0 : index
    %17 = vector.load %arg8[%c0_17, %c0_18] : memref<32x32xf32, #tpu.memory_space<vmem>>, vector<32x32xf32>
    %cst_19 = arith.constant dense<0.000000e+00> : vector<2x32xf32>
    %18 = tpu.matmul %10, %17, %cst_19 {dimension_numbers = #tpu.dot_dimension_numbers<[1], [0], [0], [1], [0, 0, 1, 1], [], []>} : vector<2x32xf32>, vector<32x32xf32>, vector<2x32xf32> -> vector<2x32xf32>
    %19 = arith.truncf %18 : vector<2x32xf32> to vector<2x32xbf16>
    %c0_20 = arith.constant 0 : index
    %c0_21 = arith.constant 0 : index
    %c0_22 = arith.constant 0 : index
    %20 = vector.load %arg12[%c0_20, %c0_21, %c0_22] : memref<1x2x32xbf16, #tpu.memory_space<vmem>>, vector<1x2x32xbf16>
    %21 = vector.shape_cast %20 : vector<1x2x32xbf16> to vector<2x32xbf16>
    %22 = vector.shape_cast %19 : vector<2x32xbf16> to vector<1x2x32xbf16>
    tpu.vector_store %arg12[%c0_20, %c0_21, %c0_22], %22 {strides = array<i32>} : memref<1x2x32xbf16, #tpu.memory_space<vmem>>, vector<1x2x32xbf16>,
    return
  }
  func.func @transform_0(%arg0: i32) -> (i32, i32) {
    %c0_i32 = arith.constant 0 : i32
    %c0_i32_0 = arith.constant 0 : i32
    %c0_i32_1 = arith.constant 0 : i32
    return %c0_i32, %c0_i32_0 : i32, i32
  }
  func.func @transform_1(%arg0: i32) -> (i32, i32) {
    %c0_i32 = arith.constant 0 : i32
    %c0_i32_0 = arith.constant 0 : i32
    %c0_i32_1 = arith.constant 0 : i32
    return %c0_i32, %c0_i32_0 : i32, i32
  }
  func.func @transform_2(%arg0: i32) -> (i32, i32, i32) {
    %c0_i32 = arith.constant 0 : i32
    %c0_i32_0 = arith.constant 0 : i32
    %c0_i32_1 = arith.constant 0 : i32
    %c0_i32_2 = arith.constant 0 : i32
    return %c0_i32, %c0_i32_0, %c0_i32_1 : i32, i32, i32
  }
  func.func @transform_3(%arg0: i32) -> (i32, i32, i32) {
    %c0_i32 = arith.constant 0 : i32
    %c0_i32_0 = arith.constant 0 : i32
    %c0_i32_1 = arith.constant 0 : i32
    %c0_i32_2 = arith.constant 0 : i32
    return %c0_i32, %c0_i32_0, %c0_i32_1 : i32, i32, i32
  }
  func.func @transform_4(%arg0: i32) -> (i32, i32) {
    %c0_i32 = arith.constant 0 : i32
    %c0_i32_0 = arith.constant 0 : i32
    %c0_i32_1 = arith.constant 0 : i32
    return %c0_i32, %c0_i32_0 : i32, i32
  }
  func.func @transform_5(%arg0: i32) -> (i32, i32) {
    %c0_i32 = arith.constant 0 : i32
    %c0_i32_0 = arith.constant 0 : i32
    %c0_i32_1 = arith.constant 0 : i32
    return %c0_i32, %c0_i32_0 : i32, i32
  }
  func.func @transform_6(%arg0: i32) -> (i32, i32) {
    %c0_i32 = arith.constant 0 : i32
    %c0_i32_0 = arith.constant 0 : i32
    %c0_i32_1 = arith.constant 0 : i32
    return %c0_i32, %c0_i32_0 : i32, i32
  }
  func.func @transform_7(%arg0: i32) -> (i32, i32) {
    %c0_i32 = arith.constant 0 : i32
    %c0_i32_0 = arith.constant 0 : i32
    %c0_i32_1 = arith.constant 0 : i32
    return %c0_i32, %c0_i32_0 : i32, i32
  }
  func.func @transform_8(%arg0: i32) -> (i32, i32) {
    %c0_i32 = arith.constant 0 : i32
    %c0_i32_0 = arith.constant 0 : i32
    %c0_i32_1 = arith.constant 0 : i32
    return %c0_i32, %c0_i32_0 : i32, i32
  }
  func.func @transform_9(%arg0: i32) -> (i32, i32) {
    %c0_i32 = arith.constant 0 : i32
    %c0_i32_0 = arith.constant 0 : i32
    %c0_i32_1 = arith.constant 0 : i32
    return %c0_i32, %c0_i32_0 : i32, i32
  }
  func.func @transform_10(%arg0: i32) -> (i32, i32, i32) {
    %c0_i32 = arith.constant 0 : i32
    %c0_i32_0 = arith.constant 0 : i32
    %c0_i32_1 = arith.constant 0 : i32
    %c0_i32_2 = arith.constant 0 : i32
    return %c0_i32, %c0_i32_0, %c0_i32_1 : i32, i32, i32
  }
  func.func @transform_11(%arg0: i32) -> (i32, i32, i32) {
    %c0_i32 = arith.constant 0 : i32
    %c0_i32_0 = arith.constant 0 : i32
    %c0_i32_1 = arith.constant 0 : i32
    %c0_i32_2 = arith.constant 0 : i32
    return %c0_i32, %c0_i32_0, %c0_i32_1 : i32, i32, i32
  }
}

</mosaic_0001>

<llo_original>
// kernel: _init_step.1
$region0: #{_init_step.1}
  #allocation0 [shape = 'u32[]', space=smem, size = 0x4, offset = 0x4, fixed_abs, tag = 'smem constant byte address 0x4 - core index']
  #allocation1 [shape = 'u32[144,128]{1,0:T(1,128)}', space=vmem, size = 0x12000, scoped, tag = 'internal scratch']
  %s0 = inlined_call_operand.hbm [shape: f32[2,4], index: 0, kind: input, shape index: {}]
  %s1 = inlined_call_operand.vmem [shape: f32[2,32], index: 1, kind: input, shape index: {}]
  %s2 = inlined_call_operand.hbm [shape: bf16[8,2,32], index: 2, kind: input, shape index: {}, may-alias: {2,10}]
  %s3 = inlined_call_operand.hbm [shape: bf16[8,2,32], index: 3, kind: input, shape index: {}, may-alias: {3,11}]
  %s4 = inlined_call_operand.vmem [shape: f32[4,32], index: 4, kind: input, shape index: {}]
  %s5 = inlined_call_operand.vmem [shape: f32[1,32], index: 5, kind: input, shape index: {}]
  %s6 = inlined_call_operand.hbm [shape: f32[32,32], index: 6, kind: input, shape index: {}]
  %s7 = inlined_call_operand.hbm [shape: f32[32,32], index: 7, kind: input, shape index: {}]
  %s8 = inlined_call_operand.hbm [shape: f32[2,32], index: 8, kind: output, shape index: {0}]
  %s9 = inlined_call_operand.hbm [shape: f32[2,32], index: 9, kind: output, shape index: {1}]
  %s10 = inlined_call_operand.hbm [shape: bf16[8,2,32], index: 10, kind: output, shape index: {2}, may-alias: {2,10}]
  %s11 = inlined_call_operand.hbm [shape: bf16[8,2,32], index: 11, kind: output, shape index: {3}, may-alias: {3,11}]
  %12 = xla_tuple %s8, %s9, %s10, %s11
  %s13 = sld [smem:[#allocation0]]
  $region86: #{_init_step.1} parent=0
    _
  %s15 = ssub.s32 1, %s13
  %s16 = scalar_select 0, %s15, %s13
  $region1: #{_init_step.1} parent=0
    #allocation2 [shape = 'u8[1024]{0}', space=vmem, size = 0x400, scoped, tag = 'input window, operand 0, single buffered']
    #allocation3 [shape = 's32[1]{0}', space=sflag, size = 0x4, scoped, tag = 'scoped memory for _init_step.1']
    #allocation4 [shape = 's32[1]{0}', space=sflag, size = 0x4, scoped, tag = 'scoped memory for _init_step.1']
    #allocation5 [shape = 'u8[512]{0}', space=vmem, size = 0x400, scoped, tag = 'input window, operand 2, single buffered']
    #allocation6 [shape = 's32[1]{0}', space=sflag, size = 0x4, scoped, tag = 'scoped memory for _init_step.1']
    #allocation7 [shape = 'u8[512]{0}', space=vmem, size = 0x400, scoped, tag = 'input window, operand 3, single buffered']
    #allocation8 [shape = 'u8[16384]{0}', space=vmem, size = 0x4000, scoped, tag = 'input window, operand 6, single buffered']
    #allocation9 [shape = 's32[1]{0}', space=sflag, size = 0x4, scoped, tag = 'scoped memory for _init_step.1']
    #allocation10 [shape = 'u8[16384]{0}', space=vmem, size = 0x4000, scoped, tag = 'input window, operand 7, single buffered']
    #allocation11 [shape = 'u8[1024]{0}', space=vmem, size = 0x400, scoped, tag = 'output window, operand 0, single buffered']
    #allocation12 [shape = 'u8[1024]{0}', space=vmem, size = 0x400, scoped, tag = 'output window, operand 1, single buffered']
    #allocation13 [shape = 's32[1]{0}', space=sflag, size = 0x4, scoped, tag = 'scoped memory for _init_step.1']
    #allocation14 [shape = 'u8[512]{0}', space=vmem, size = 0x400, scoped, tag = 'output window, operand 2, single buffered']
    #allocation15 [shape = 'u8[512]{0}', space=vmem, size = 0x400, scoped, tag = 'output window, operand 3, single buffered']
    #allocation16 [shape = 's32[1]{0}', space=sflag, size = 0x4, scoped, tag = 'scoped memory for _init_step.1']
    %17 = vsyncpa [#allocation3], 0
    %18 = vsyncpa [#allocation6], 0
    %19 = vsyncpa [#allocation9], 0
    %20 = vsyncpa [#allocation4], 0
    %21 = vsyncpa [#allocation13], 0
    %22 = vsyncpa [#allocation16], 0
    // Predicated region
    $region2: #{_init_step.1} parent=1 // pred_check
      _
    $region3: #{_init_step.1} parent=1 // pred_check_branch
      %24 = sbr.rel (0) target = $region5
    $region4: #{_init_step.1} parent=1 // pred_region
      %s26 = ssub.s32 32, 32
      %27 = vsyncadd [#allocation3], %s26
      %s29 = sshll.u32 [#allocation2], 4
      %s30 = int_to_ptr.vmem [resolvable:$true] %s29
      %32 = dma.hbm_to_vmem [thread:$0]  %s0, 32, %s30, [#allocation3]
    $region5: #{_init_step.1} parent=1 // pred_fallthru
      _
    // Predicated region
    $region6: #{_init_step.1} parent=1 // pred_check
      _
    $region7: #{_init_step.1} parent=1 // pred_check_branch
      %34 = sbr.rel (0) target = $region9
    $region8: #{_init_step.1} parent=1 // pred_region
      _
    $region9: #{_init_step.1} parent=1 // pred_fallthru
      _
    // Predicated region
    $region10: #{_init_step.1} parent=1 // pred_check
      _
    $region11: #{_init_step.1} parent=1 // pred_check_branch
      %36 = sbr.rel (0) target = $region13
    $region12: #{_init_step.1} parent=1 // pred_region
      %s38 = ssub.s32 16, 16
      %39 = vsyncadd [#allocation6], %s38
      %s41 = sshll.u32 [#allocation5], 4
      %s42 = int_to_ptr.vmem [resolvable:$true] %s41
      %44 = dma.hbm_to_vmem [thread:$0]  %s2, 16, %s42, [#allocation6]
    $region13: #{_init_step.1} parent=1 // pred_fallthru
      _
    // Predicated region
    $region14: #{_init_step.1} parent=1 // pred_check
      _
    $region15: #{_init_step.1} parent=1 // pred_check_branch
      %46 = sbr.rel (0) target = $region17
    $region16: #{_init_step.1} parent=1 // pred_region
      %s48 = ssub.s32 16, 16
      %49 = vsyncadd [#allocation6], %s48
      %s51 = sshll.u32 [#allocation7], 4
      %s52 = int_to_ptr.vmem [resolvable:$true] %s51
      %54 = dma.hbm_to_vmem [thread:$0]  %s3, 16, %s52, [#allocation6]
    $region17: #{_init_step.1} parent=1 // pred_fallthru
      _
    // Predicated region
    $region18: #{_init_step.1} parent=1 // pred_check
      _
    $region19: #{_init_step.1} parent=1 // pred_check_branch
      %56 = sbr.rel (0) target = $region21
    $region20: #{_init_step.1} parent=1 // pred_region
      _
    $region21: #{_init_step.1} parent=1 // pred_fallthru
      _
    // Predicated region
    $region22: #{_init_step.1} parent=1 // pred_check
      _
    $region23: #{_init_step.1} parent=1 // pred_check_branch
      %58 = sbr.rel (0) target = $region25
    $region24: #{_init_step.1} parent=1 // pred_region
      _
    $region25: #{_init_step.1} parent=1 // pred_fallthru
      _
    // Predicated region
    $region26: #{_init_step.1} parent=1 // pred_check
      _
    $region27: #{_init_step.1} parent=1 // pred_check_branch
      %60 = sbr.rel (0) target = $region29
    $region28: #{_init_step.1} parent=1 // pred_region
      %s62 = ssub.s32 512, 512
      %63 = vsyncadd [#allocation9], %s62
      %s64 = sshll.u32 [#allocation8], 4
      %s65 = int_to_ptr.vmem [resolvable:$true] %s64
      %70 = dma.hbm_to_vmem [thread:$0]  %s6, 512, %s65, [#allocation9], 128, 128, 8
    $region29: #{_init_step.1} parent=1 // pred_fallthru
      _
    // Predicated region
    $region30: #{_init_step.1} parent=1 // pred_check
      _
    $region31: #{_init_step.1} parent=1 // pred_check_branch
      %72 = sbr.rel (0) target = $region33
    $region32: #{_init_step.1} parent=1 // pred_region
      %s74 = ssub.s32 512, 512
      %75 = vsyncadd [#allocation9], %s74
      %s76 = sshll.u32 [#allocation10], 4
      %s77 = int_to_ptr.vmem [resolvable:$true] %s76
      %82 = dma.hbm_to_vmem [thread:$0]  %s7, 512, %s77, [#allocation9], 128, 128, 8
    $region33: #{_init_step.1} parent=1 // pred_fallthru
      _
    // Predicated region
    $region34: #{_init_step.1} parent=1 // pred_check
      _
    $region35: #{_init_step.1} parent=1 // pred_check_branch
      %84 = sbr.rel (0) target = $region37
    $region36: #{_init_step.1} parent=1 // pred_region
      %85 = dma.done [#allocation3], 32
    $region37: #{_init_step.1} parent=1 // pred_fallthru
      _
    // Predicated region
    $region38: #{_init_step.1} parent=1 // pred_check
      _
    $region39: #{_init_step.1} parent=1 // pred_check_branch
      %87 = sbr.rel (0) target = $region41
    $region40: #{_init_step.1} parent=1 // pred_region
      %88 = dma.done [#allocation6], 16
    $region41: #{_init_step.1} parent=1 // pred_fallthru
      _
    // Predicated region
    $region42: #{_init_step.1} parent=1 // pred_check
      _
    $region43: #{_init_step.1} parent=1 // pred_check_branch
      %90 = sbr.rel (0) target = $region45
    $region44: #{_init_step.1} parent=1 // pred_region
      %91 = dma.done [#allocation6], 16
    $region45: #{_init_step.1} parent=1 // pred_fallthru
      _
    // Predicated region
    $region46: #{_init_step.1} parent=1 // pred_check
      _
    $region47: #{_init_step.1} parent=1 // pred_check_branch
      %93 = sbr.rel (0) target = $region49
    $region48: #{_init_step.1} parent=1 // pred_region
      %94 = dma.done [#allocation9], 512
    $region49: #{_init_step.1} parent=1 // pred_fallthru
      _
    // Predicated region
    $region50: #{_init_step.1} parent=1 // pred_check
      _
    $region51: #{_init_step.1} parent=1 // pred_check_branch
      %96 = sbr.rel (0) target = $region53
    $region52: #{_init_step.1} parent=1 // pred_region
      %97 = dma.done [#allocation9], 512
    $region53: #{_init_step.1} parent=1 // pred_fallthru
      _
    %v98 = vld [vmem:[#allocation2] sm:$0x3]
    %v99 = vld [vmem:[%s4] sm:$0xf]
    %v100 = vld [vmem:[%s5] sm:$0x1]
    %v102 = vlaneseq
    %v103 = vshrl.u32 %v102, 7
    %v104 = vsub.s32 0, %v103
    %v105 = vrot.slane %v100, %v104
    %vm107 = vcmask 31744
    %v109 = vsel %vm107, %v98, 0
    %vm111 = vcmask 1043456
    %v113 = vsel %vm111, %v99, 0
    %115 = vmatprep.subr.mxu0 0.0
    %116 = vmatpush1.msra.mxu0 %v113
    %117 = vmatprep.subr.mxu0 0.0
    %118 = vmatpush1.msra.mxu0 0.0
    %119 = vmatprep.subr.mxu0 0.0
    %120 = vmatpush1.msra.mxu0 0.0
    %121 = vmatprep.subr.mxu0 0.0
    %122 = vmatpush1.msra.mxu0 0.0
    %123 = vmatprep.subr.mxu0 0.0
    %124 = vmatpush1.msra.mxu0 0.0
    %125 = vmatprep.subr.mxu0 0.0
    %126 = vmatpush1.msra.mxu0 0.0
    %127 = vmatprep.subr.mxu0 0.0
    %128 = vmatpush1.msra.mxu0 0.0
    %129 = vmatprep.subr.mxu0 0.0
    %130 = vmatpush1.msra.mxu0 0.0
    %131 = vmatprep.subr.mxu0 0.0
    %132 = vmatpush1.msra.mxu0 0.0
    %133 = vmatprep.subr.mxu0 0.0
    %134 = vmatpush1.msra.mxu0 0.0
    %135 = vmatprep.subr.mxu0 0.0
    %136 = vmatpush1.msra.mxu0 0.0
    %137 = vmatprep.subr.mxu0 0.0
    %138 = vmatpush1.msra.mxu0 0.0
    %139 = vmatprep.subr.mxu0 0.0
    %140 = vmatpush1.msra.mxu0 0.0
    %141 = vmatprep.subr.mxu0 0.0
    %142 = vmatpush1.msra.mxu0 0.0
    %143 = vmatprep.subr.mxu0 0.0
    %144 = vmatpush1.msra.mxu0 0.0
    %145 = vmatprep.subr.mxu0 0.0
    %146 = vmatpush1.msra.mxu0 0.0
    %147 = vmatprep.subr.mxu0 0.0
    %148 = vmatpush1.msra.mxu0 0.0
    %149 = vmatprep.subr.mxu0 0.0
    %150 = vmatpush1.msra.mxu0 0.0
    %151 = vmatprep.subr.mxu0 0.0
    %152 = vmatpush1.msra.mxu0 0.0
    %153 = vmatprep.subr.mxu0 0.0
    %154 = vmatpush1.msra.mxu0 0.0
    %155 = vmatprep.subr.mxu0 0.0
    %156 = vmatpush1.msra.mxu0 0.0
    %157 = vmatprep.subr.mxu0 0.0
    %158 = vmatpush1.msra.mxu0 0.0
    %159 = vmatprep.subr.mxu0 0.0
    %160 = vmatpush1.msra.mxu0 0.0
    %161 = vmatprep.subr.mxu0 0.0
    %162 = vmatpush1.msra.mxu0 0.0
    %163 = vmatprep.subr.mxu0 0.0
    %164 = vmatpush1.msra.mxu0 0.0
    %165 = vmatprep.subr.mxu0 0.0
    %166 = vmatpush1.msra.mxu0 0.0
    %167 = vmatprep.subr.mxu0 0.0
    %168 = vmatpush1.msra.mxu0 0.0
    %169 = vmatprep.subr.mxu0 0.0
    %170 = vmatpush1.msra.mxu0 0.0
    %171 = vmatprep.subr.mxu0 0.0
    %172 = vmatpush1.msra.mxu0 0.0
    %173 = vmatprep.subr.mxu0 0.0
    %174 = vmatpush1.msra.mxu0 0.0
    %175 = vmatprep.subr.mxu0 0.0
    %176 = vmatpush1.msra.mxu0 0.0
    %177 = vmatprep.subr.mxu0 0.0
    %178 = vmatpush1.msra.mxu0 0.0
    %179 = vmatprep.mubr.f32.mxu0 0.0
    %180 = vmatmul.mubr.f32.gmra.mrb[0].mxu0 %v109
    %v181 = vpop.f32.mrb[0].mxu0
    %v182 = vadd.f32 %v105, %v181
    %v183 = vpop.f32.mrb[0].mxu0
    %184 = vdwg.mxu0
    %v185 = vld [vmem:[%s1] sm:$0x3]
    %v186 = vld [vmem:[#allocation8] sm:$0xff]
    %v187 = vld [vmem:[#allocation8 + $0x8] sm:$0xff]
    %v188 = vld [vmem:[#allocation8 + $0x10] sm:$0xff]
    %v189 = vld [vmem:[#allocation8 + $0x18] sm:$0xff]
    %vm190 = vcmask 261120
    %v192 = vsel %vm190, %v185, 0
    %194 = vmatprep.subr.mxu0 0.0
    %195 = vmatpush1.msra.mxu0 %v186
    %196 = vmatprep.subr.mxu0 0.0
    %197 = vmatpush1.msra.mxu0 %v187
    %198 = vmatprep.subr.mxu0 0.0
    %199 = vmatpush1.msra.mxu0 %v188
    %200 = vmatprep.subr.mxu0 0.0
    %201 = vmatpush1.msra.mxu0 %v189
    %202 = vmatprep.subr.mxu0 0.0
    %203 = vmatpush1.msra.mxu0 0.0
    %204 = vmatprep.subr.mxu0 0.0
    %205 = vmatpush1.msra.mxu0 0.0
    %206 = vmatprep.subr.mxu0 0.0
    %207 = vmatpush1.msra.mxu0 0.0
    %208 = vmatprep.subr.mxu0 0.0
    %209 = vmatpush1.msra.mxu0 0.0
    %210 = vmatprep.subr.mxu0 0.0
    %211 = vmatpush1.msra.mxu0 0.0
    %212 = vmatprep.subr.mxu0 0.0
    %213 = vmatpush1.msra.mxu0 0.0
    %214 = vmatprep.subr.mxu0 0.0
    %215 = vmatpush1.msra.mxu0 0.0
    %216 = vmatprep.subr.mxu0 0.0
    %217 = vmatpush1.msra.mxu0 0.0
    %218 = vmatprep.subr.mxu0 0.0
    %219 = vmatpush1.msra.mxu0 0.0
    %220 = vmatprep.subr.mxu0 0.0
    %221 = vmatpush1.msra.mxu0 0.0
    %222 = vmatprep.subr.mxu0 0.0
    %223 = vmatpush1.msra.mxu0 0.0
    %224 = vmatprep.subr.mxu0 0.0
    %225 = vmatpush1.msra.mxu0 0.0
    %226 = vmatprep.subr.mxu0 0.0
    %227 = vmatpush1.msra.mxu0 0.0
    %228 = vmatprep.subr.mxu0 0.0
    %229 = vmatpush1.msra.mxu0 0.0
    %230 = vmatprep.subr.mxu0 0.0
    %231 = vmatpush1.msra.mxu0 0.0
    %232 = vmatprep.subr.mxu0 0.0
    %233 = vmatpush1.msra.mxu0 0.0
    %234 = vmatprep.subr.mxu0 0.0
    %235 = vmatpush1.msra.mxu0 0.0
    %236 = vmatprep.subr.mxu0 0.0
    %237 = vmatpush1.msra.mxu0 0.0
    %238 = vmatprep.subr.mxu0 0.0
    %239 = vmatpush1.msra.mxu0 0.0
    %240 = vmatprep.subr.mxu0 0.0
    %241 = vmatpush1.msra.mxu0 0.0
    %242 = vmatprep.subr.mxu0 0.0
    %243 = vmatpush1.msra.mxu0 0.0
    %244 = vmatprep.subr.mxu0 0.0
    %245 = vmatpush1.msra.mxu0 0.0
    %246 = vmatprep.subr.mxu0 0.0
    %247 = vmatpush1.msra.mxu0 0.0
    %248 = vmatprep.subr.mxu0 0.0
    %249 = vmatpush1.msra.mxu0 0.0
    %250 = vmatprep.subr.mxu0 0.0
    %251 = vmatpush1.msra.mxu0 0.0
    %252 = vmatprep.subr.mxu0 0.0
    %253 = vmatpush1.msra.mxu0 0.0
    %254 = vmatprep.subr.mxu0 0.0
    %255 = vmatpush1.msra.mxu0 0.0
    %256 = vmatprep.subr.mxu0 0.0
    %257 = vmatpush1.msra.mxu0 0.0
    %258 = vmatprep.mubr.f32.mxu0 0.0
    %259 = vmatmul.mubr.f32.gmra.mrb[0].mxu0 %v192
    %v260 = vpop.f32.mrb[0].mxu0
    %v261 = vadd.f32 0.0, %v260
    %v262 = vpop.f32.mrb[0].mxu0
    %263 = vdwg.mxu0
    %v264 = vadd.f32 %v182, %v261
    %v265 = vtanh.pop %v264
    %vm266 = vcmask 254976
    %267 = vst.msk [vmem:[#allocation12] sm:$0x3] %vm266, %v264
    %268 = vst.msk [vmem:[#allocation11] sm:$0x3] %vm266, %v265
    %v269 = vpack.c.bf16 %v265, %v265
    %vm270 = vcmask 253952
    %271 = vst.msk [vmem:[#allocation14] sm:$0x1] %vm270, %v269
    %v272 = vld [vmem:[#allocation10] sm:$0xff]
    %v273 = vld [vmem:[#allocation10 + $0x8] sm:$0xff]
    %v274 = vld [vmem:[#allocation10 + $0x10] sm:$0xff]
    %v275 = vld [vmem:[#allocation10 + $0x18] sm:$0xff]
    %v277 = vsel %vm190, %v265, 0
    %279 = vmatprep.subr.mxu0 0.0
    %280 = vmatpush1.msra.mxu0 %v272
    %281 = vmatprep.subr.mxu0 0.0
    %282 = vmatpush1.msra.mxu0 %v273
    %283 = vmatprep.subr.mxu0 0.0
    %284 = vmatpush1.msra.mxu0 %v274
    %285 = vmatprep.subr.mxu0 0.0
    %286 = vmatpush1.msra.mxu0 %v275
    %287 = vmatprep.subr.mxu0 0.0
    %288 = vmatpush1.msra.mxu0 0.0
    %289 = vmatprep.subr.mxu0 0.0
    %290 = vmatpush1.msra.mxu0 0.0
    %291 = vmatprep.subr.mxu0 0.0
    %292 = vmatpush1.msra.mxu0 0.0
    %293 = vmatprep.subr.mxu0 0.0
    %294 = vmatpush1.msra.mxu0 0.0
    %295 = vmatprep.subr.mxu0 0.0
    %296 = vmatpush1.msra.mxu0 0.0
    %297 = vmatprep.subr.mxu0 0.0
    %298 = vmatpush1.msra.mxu0 0.0
    %299 = vmatprep.subr.mxu0 0.0
    %300 = vmatpush1.msra.mxu0 0.0
    %301 = vmatprep.subr.mxu0 0.0
    %302 = vmatpush1.msra.mxu0 0.0
    %303 = vmatprep.subr.mxu0 0.0
    %304 = vmatpush1.msra.mxu0 0.0
    %305 = vmatprep.subr.mxu0 0.0
    %306 = vmatpush1.msra.mxu0 0.0
    %307 = vmatprep.subr.mxu0 0.0
    %308 = vmatpush1.msra.mxu0 0.0
    %309 = vmatprep.subr.mxu0 0.0
    %310 = vmatpush1.msra.mxu0 0.0
    %311 = vmatprep.subr.mxu0 0.0
    %312 = vmatpush1.msra.mxu0 0.0
    %313 = vmatprep.subr.mxu0 0.0
    %314 = vmatpush1.msra.mxu0 0.0
    %315 = vmatprep.subr.mxu0 0.0
    %316 = vmatpush1.msra.mxu0 0.0
    %317 = vmatprep.subr.mxu0 0.0
    %318 = vmatpush1.msra.mxu0 0.0
    %319 = vmatprep.subr.mxu0 0.0
    %320 = vmatpush1.msra.mxu0 0.0
    %321 = vmatprep.subr.mxu0 0.0
    %322 = vmatpush1.msra.mxu0 0.0
    %323 = vmatprep.subr.mxu0 0.0
    %324 = vmatpush1.msra.mxu0 0.0
    %325 = vmatprep.subr.mxu0 0.0
    %326 = vmatpush1.msra.mxu0 0.0
    %327 = vmatprep.subr.mxu0 0.0
    %328 = vmatpush1.msra.mxu0 0.0
    %329 = vmatprep.subr.mxu0 0.0
    %330 = vmatpush1.msra.mxu0 0.0
    %331 = vmatprep.subr.mxu0 0.0
    %332 = vmatpush1.msra.mxu0 0.0
    %333 = vmatprep.subr.mxu0 0.0
    %334 = vmatpush1.msra.mxu0 0.0
    %335 = vmatprep.subr.mxu0 0.0
    %336 = vmatpush1.msra.mxu0 0.0
    %337 = vmatprep.subr.mxu0 0.0
    %338 = vmatpush1.msra.mxu0 0.0
    %339 = vmatprep.subr.mxu0 0.0
    %340 = vmatpush1.msra.mxu0 0.0
    %341 = vmatprep.subr.mxu0 0.0
    %342 = vmatpush1.msra.mxu0 0.0
    %343 = vmatprep.mubr.f32.mxu0 0.0
    %344 = vmatmul.mubr.f32.gmra.mrb[0].mxu0 %v277
    %v345 = vpop.f32.mrb[0].mxu0
    %v346 = vadd.f32 0.0, %v345
    %v347 = vpop.f32.mrb[0].mxu0
    %348 = vdwg.mxu0
    %v349 = vpack.c.bf16 %v346, %v346
    %350 = vst.msk [vmem:[#allocation15] sm:$0x1] %vm270, %v349
    // Predicated region
    $region54: #{_init_step.1} parent=1 // pred_check
      _
    $region55: #{_init_step.1} parent=1 // pred_check_branch
      %352 = sbr.rel (0) target = $region57
    $region56: #{_init_step.1} parent=1 // pred_region
      %s354 = ssub.s32 32, 32
      %355 = vsyncadd [#allocation4], %s354
      %s357 = sshll.u32 [#allocation11], 4
      %s358 = int_to_ptr.vmem [resolvable:$true] %s357
      %360 = dma.vmem_to_hbm [thread:$0]  %s358, 32, %s8, [#allocation4]
    $region57: #{_init_step.1} parent=1 // pred_fallthru
      _
    // Predicated region
    $region58: #{_init_step.1} parent=1 // pred_check
      _
    $region59: #{_init_step.1} parent=1 // pred_check_branch
      %362 = sbr.rel (0) target = $region61
    $region60: #{_init_step.1} parent=1 // pred_region
      %s364 = ssub.s32 32, 32
      %365 = vsyncadd [#allocation13], %s364
      %s367 = sshll.u32 [#allocation12], 4
      %s368 = int_to_ptr.vmem [resolvable:$true] %s367
      %370 = dma.vmem_to_hbm [thread:$0]  %s368, 32, %s9, [#allocation13]
    $region61: #{_init_step.1} parent=1 // pred_fallthru
      _
    // Predicated region
    $region62: #{_init_step.1} parent=1 // pred_check
      _
    $region63: #{_init_step.1} parent=1 // pred_check_branch
      %372 = sbr.rel (0) target = $region65
    $region64: #{_init_step.1} parent=1 // pred_region
      %s374 = ssub.s32 16, 16
      %375 = vsyncadd [#allocation13], %s374
      %s377 = sshll.u32 [#allocation14], 4
      %s378 = int_to_ptr.vmem [resolvable:$true] %s377
      %380 = dma.vmem_to_hbm [thread:$0]  %s378, 16, %s10, [#allocation13]
    $region65: #{_init_step.1} parent=1 // pred_fallthru
      _
    // Predicated region
    $region66: #{_init_step.1} parent=1 // pred_check
      _
    $region67: #{_init_step.1} parent=1 // pred_check_branch
      %382 = sbr.rel (0) target = $region69
    $region68: #{_init_step.1} parent=1 // pred_region
      %s384 = ssub.s32 16, 16
      %385 = vsyncadd [#allocation16], %s384
      %s387 = sshll.u32 [#allocation15], 4
      %s388 = int_to_ptr.vmem [resolvable:$true] %s387
      %390 = dma.vmem_to_hbm [thread:$0]  %s388, 16, %s11, [#allocation16]
    $region69: #{_init_step.1} parent=1 // pred_fallthru
      _
    // Predicated region
    $region70: #{_init_step.1} parent=1 // pred_check
      _
    $region71: #{_init_step.1} parent=1 // pred_check_branch
      %392 = sbr.rel (0) target = $region73
    $region72: #{_init_step.1} parent=1 // pred_region
      %393 = dma.done [#allocation4], 32
    $region73: #{_init_step.1} parent=1 // pred_fallthru
      _
    // Predicated region
    $region74: #{_init_step.1} parent=1 // pred_check
      _
    $region75: #{_init_step.1} parent=1 // pred_check_branch
      %395 = sbr.rel (0) target = $region77
    $region76: #{_init_step.1} parent=1 // pred_region
      %396 = dma.done [#allocation13], 32
    $region77: #{_init_step.1} parent=1 // pred_fallthru
      _
    // Predicated region
    $region78: #{_init_step.1} parent=1 // pred_check
      _
    $region79: #{_init_step.1} parent=1 // pred_check_branch
      %398 = sbr.rel (0) target = $region81
    $region80: #{_init_step.1} parent=1 // pred_region
      %399 = dma.done [#allocation13], 16
    $region81: #{_init_step.1} parent=1 // pred_fallthru
      _
    // Predicated region
    $region82: #{_init_step.1} parent=1 // pred_check
      _
    $region83: #{_init_step.1} parent=1 // pred_check_branch
      %401 = sbr.rel (0) target = $region85
    $region84: #{_init_step.1} parent=1 // pred_region
      %402 = dma.done [#allocation16], 16
    $region85: #{_init_step.1} parent=1 // pred_fallthru
      _
    %403 = vsyncpa [#allocation3], 1
    %404 = vsyncpa [#allocation6], 1
    %405 = vsyncpa [#allocation9], 1
    %406 = vsyncpa [#allocation4], 1
    %407 = vsyncpa [#allocation13], 1
    %408 = vsyncpa [#allocation16], 1

</llo_original>
